<compile_context>
chip_gen: v7x
topology: tpu7x:2x2x1
jax: 0.10.0
libtpu: 0.0.40
codegen_flags: <defaults>
</compile_context>

<pallas_src>
import jax
import jax.numpy as jnp
from jax.experimental import pallas as pl
from jax.experimental.pallas import tpu as pltpu

# Hard-coded by the module's __init__:  f1, g1, k1, h1 = (1, 64, 25, 15); c = 6
K_CHEB = 25      # Chebyshev polynomial order
H_TIME = 15      # time-window length contracted by the conv
G_OUT = 64       # conv output channels
N_CLASSES = 6    # classifier classes


def fused_tgcn_kernel(x_ref, wconv_ref, bconv_ref, wfc_ref, bfc_ref, o_ref):
    """Entire NetTGCNBasic forward for the whole batch in one grid-free invocation.

    x_ref:     (B, N*H)   f32   flattened node time-series (node-major, time-minor)
    wconv_ref: (N*H, N*G) bf16  folded Chebyshev-time graph-conv operator
    bconv_ref: (1, N*G)   f32   conv bias broadcast over nodes
    wfc_ref:   (N*G, C)   f32   classifier weight (transpose of torch layout)
    bfc_ref:   (1, C)     f32   classifier bias
    o_ref:     (B, C)     f32   log_softmax(logits)
    """
    # ChebTimeConv (graph + time + channel mixing) as one lane-dense batched MXU matmul
    # (bf16 inputs, f32 accumulation), then fused bias + ReLU on the VPU in f32.
    x = x_ref[...].astype(jnp.bfloat16)                                       # (B, N*H)
    h = jnp.dot(x, wconv_ref[...], preferred_element_type=jnp.float32)        # (B, N*G) f32
    h = jnp.maximum(h + bconv_ref[...], 0.0)                                  # fused F.relu

    # fc1 (Linear N*G -> C) + log_softmax(dim=1); tiny matmul kept fully in f32.
    logits = jnp.dot(h, wfc_ref[...], preferred_element_type=jnp.float32) + bfc_ref[...]
    m = jnp.max(logits, axis=-1, keepdims=True)
    s = logits - m
    lse = jnp.log(jnp.sum(jnp.exp(s), axis=-1, keepdims=True))
    o_ref[...] = s - lse


def fold_cheb_conv(lap_hat, w_cheb, b_cheb):
    """Precompute the Chebyshev basis T_k(L_hat) on the fixed graph and fold it with the
    (K, H, G) conv weight into a dense (N*H, N*G) operator (stored bf16 for the MXU) plus a
    (1, N*G) f32 bias.  Runs once at model init (plain JAX/XLA), never in the forward path."""
    N = lap_hat.shape[0]
    K, H, G = w_cheb.shape

    t_prev = jnp.eye(N, dtype=jnp.float32)       # T0 = I
    t_cur = lap_hat                              # T1 = L_hat
    basis = [t_prev, t_cur]
    for _ in range(2, K):                        # Tk = 2 L_hat T(k-1) - T(k-2)
        t_next = 2.0 * (lap_hat @ t_cur) - t_prev
        basis.append(t_next)
        t_prev, t_cur = t_cur, t_next
    basis = jnp.stack(basis, axis=0)             # (K, N, N)

    # W_conv[(m,h), (n,g)] = sum_k T_k[n, m] * w_cheb[k, h, g]
    w_conv = jnp.einsum('knm,khg->mhng', basis, w_cheb).reshape(N * H, N * G)
    b_conv = jnp.broadcast_to(b_cheb.reshape(1, G), (N, G)).reshape(1, N * G)
    return w_conv.astype(jnp.bfloat16), b_conv.astype(jnp.float32)


def prepare_params(lap_hat, w_cheb, b_cheb, w_fc, b_fc):
    """One-time (model-init) weight preparation, hoisted out of the per-call forward path."""
    w_conv, b_conv = fold_cheb_conv(lap_hat, w_cheb, b_cheb)
    return (w_conv, b_conv,
            w_fc.astype(jnp.float32),
            b_fc.reshape(1, -1).astype(jnp.float32))


def tgcn_forward(x, w_conv, b_conv, w_fc, b_fc):
    B, N, H = x.shape
    NH, NG = w_conv.shape
    C = w_fc.shape[-1]

    # torch-order flatten of the input: x[b, m, h] -> column m*H + h (node-major, time-minor)
    x_flat = x.reshape(B, NH).astype(jnp.float32)

    vmem = pl.BlockSpec(memory_space=pltpu.MemorySpace.VMEM)  # whole-array blocks, VMEM-resident
    cost = pl.CostEstimate(
        flops=2 * B * NH * NG + 2 * B * NG * C,
        transcendentals=B * C,                                   # exp() in log_softmax
        bytes_accessed=(x_flat.size * 4
                        + w_conv.size * w_conv.dtype.itemsize
                        + b_conv.size * 4
                        + w_fc.size * 4
                        + b_fc.size * 4
                        + B * C * 4),
    )

    out = pl.pallas_call(
        fused_tgcn_kernel,
        out_shape=jax.ShapeDtypeStruct((B, C), jnp.float32),
        in_specs=[vmem, vmem, vmem, vmem, vmem],
        out_specs=vmem,
        cost_estimate=cost,
    )(x_flat, w_conv, b_conv, w_fc, b_fc)
    return out


def reference_forward(x, lap_hat, w_cheb, b_cheb, w_fc, b_fc):
    """Pure-JAX f32 reference (explicit Cheb recursion, no fold) for correctness checking."""
    B, N, H = x.shape
    K, _, G = w_cheb.shape
    t_prev = x                                                   # T0 x
    t_cur = jnp.einsum('nm,bmh->bnh', lap_hat, x)                # T1 x
    terms = [t_prev, t_cur]
    for _ in range(2, K):
        t_next = 2.0 * jnp.einsum('nm,bmh->bnh', lap_hat, t_cur) - t_prev
        terms.append(t_next)
        t_prev, t_cur = t_cur, t_next
    tx = jnp.stack(terms, axis=0)                                # (K, B, N, H)
    conv = jnp.einsum('kbnh,khg->bng', tx, w_cheb) + b_cheb.reshape(1, 1, G)
    h = jnp.maximum(conv, 0.0).reshape(B, N * G)
    logits = h @ w_fc + b_fc.reshape(1, -1)
    return jax.nn.log_softmax(logits, axis=-1)


if __name__ == "__main__":
    key = jax.random.PRNGKey(0)
    B, N = 2, 16   # small synthetic graph: n2 = graphs[0].shape[0] = 16 nodes, batch = 2
    k_x, k_adj, k_w1, k_b1, k_w2, k_b2 = jax.random.split(key, 6)

    # synthetic fMRI windows: [B, N, H]
    x = jax.random.normal(k_x, (B, N, H_TIME), dtype=jnp.float32)

    # synthetic undirected graph (plays the role of coos[0] / edge_index)
    a = (jax.random.uniform(k_adj, (N, N)) < 0.3).astype(jnp.float32)
    a = jnp.triu(a, 1)
    A = a + a.T
    deg = jnp.sum(A, axis=1)
    d_inv_sqrt = jnp.where(deg > 0, 1.0 / jnp.sqrt(deg), 0.0)
    # PyG ChebConv.norm with lambda_max = 2:  L_hat = L - I = -D^{-1/2} A D^{-1/2}
    lap_hat = -(d_inv_sqrt[:, None] * A * d_inv_sqrt[None, :]).astype(jnp.float32)

    # ChebTimeConv params: weight (K, H, Fin=1, Fout) -> (K, H, G), bias (G,)
    w_cheb = 0.05 * jax.random.normal(k_w1, (K_CHEB, H_TIME, G_OUT), dtype=jnp.float32)
    b_cheb = 0.05 * jax.random.normal(k_b1, (1, G_OUT), dtype=jnp.float32)

    # fc1 = Linear(N*G, 6): torch stores weight as (6, N*G); kernel consumes its transpose
    w_fc = 0.05 * jax.random.normal(k_w2, (N * G_OUT, N_CLASSES), dtype=jnp.float32)
    b_fc = 0.05 * jax.random.normal(k_b2, (1, N_CLASSES), dtype=jnp.float32)

    # One-time weight fold at "model init" (outside the per-call forward path).
    params = prepare_params(lap_hat, w_cheb, b_cheb, w_fc, b_fc)
    params = jax.block_until_ready(params)

    fwd = jax.jit(tgcn_forward)
    out = fwd(x, *params)
    jax.block_until_ready(out)

    assert out.shape == (B, N_CLASSES) and out.dtype == jnp.float32
    assert bool(jnp.all(jnp.isfinite(out)))
    # log_softmax self-consistency: probabilities of each row sum to 1
    assert bool(jnp.all(jnp.abs(jnp.sum(jnp.exp(out), axis=-1) - 1.0) < 1e-3))
    # Match the unfused f32 pure-JAX reference (generous tolerance covers bf16 weight storage).
    ref = reference_forward(x, lap_hat, w_cheb, b_cheb, w_fc, b_fc)
    assert bool(jnp.max(jnp.abs(out - ref)) < 1e-1)
    print("KERNEL_OK")
</pallas_src>

<mosaic_0001>
module attributes {stable_mosaic.version = 11 : i64} {
  func.func @fused_tgcn_kernel(%arg0: memref<2x240xf32, #tpu.memory_space<vmem>>, %arg1: memref<240x1024xbf16, #tpu.memory_space<vmem>>, %arg2: memref<1x1024xf32, #tpu.memory_space<vmem>>, %arg3: memref<1024x6xf32, #tpu.memory_space<vmem>>, %arg4: memref<1x6xf32, #tpu.memory_space<vmem>>, %arg5: memref<2x6xf32, #tpu.memory_space<vmem>>) attributes {dimension_semantics = [], scalar_prefetch = 0 : i64, scratch_operands = 0 : i64, tpu.core_type = #tpu.core_type<tc>} {
    %c0 = arith.constant 0 : index
    %c0_0 = arith.constant 0 : index
    %0 = vector.load %arg0[%c0, %c0_0] : memref<2x240xf32, #tpu.memory_space<vmem>>, vector<2x240xf32>
    %1 = arith.truncf %0 : vector<2x240xf32> to vector<2x240xbf16>
    %c0_1 = arith.constant 0 : index
    %c0_2 = arith.constant 0 : index
    %2 = vector.load %arg1[%c0_1, %c0_2] : memref<240x1024xbf16, #tpu.memory_space<vmem>>, vector<240x1024xbf16>
    %cst = arith.constant dense<0.000000e+00> : vector<2x1024xf32>
    %3 = tpu.matmul %1, %2, %cst {dimension_numbers = #tpu.dot_dimension_numbers<[1], [0], [0], [1], [0, 0, 1, 1], [], []>} : vector<2x240xbf16>, vector<240x1024xbf16>, vector<2x1024xf32> -> vector<2x1024xf32>
    %c0_3 = arith.constant 0 : index
    %c0_4 = arith.constant 0 : index
    %4 = vector.load %arg2[%c0_3, %c0_4] : memref<1x1024xf32, #tpu.memory_space<vmem>>, vector<1x1024xf32>
    %5 = vector.broadcast %4 : vector<1x1024xf32> to vector<2x1024xf32>
    %6 = arith.addf %3, %5 : vector<2x1024xf32>
    %cst_5 = arith.constant 0.000000e+00 : f32
    %7 = vector.broadcast %cst_5 : f32 to vector<2x1024xf32>
    %8 = arith.maximumf %6, %7 : vector<2x1024xf32>
    %c0_6 = arith.constant 0 : index
    %c0_7 = arith.constant 0 : index
    %9 = vector.load %arg3[%c0_6, %c0_7] : memref<1024x6xf32, #tpu.memory_space<vmem>>, vector<1024x6xf32>
    %cst_8 = arith.constant dense<0.000000e+00> : vector<2x6xf32>
    %10 = tpu.matmul %8, %9, %cst_8 {dimension_numbers = #tpu.dot_dimension_numbers<[1], [0], [0], [1], [0, 0, 1, 1], [], []>} : vector<2x1024xf32>, vector<1024x6xf32>, vector<2x6xf32> -> vector<2x6xf32>
    %c0_9 = arith.constant 0 : index
    %c0_10 = arith.constant 0 : index
    %11 = vector.load %arg4[%c0_9, %c0_10] : memref<1x6xf32, #tpu.memory_space<vmem>>, vector<1x6xf32>
    %12 = vector.broadcast %11 : vector<1x6xf32> to vector<2x6xf32>
    %13 = arith.addf %10, %12 : vector<2x6xf32>
    %cst_11 = arith.constant dense<0xFF800000> : vector<2xf32>
    %14 = vector.multi_reduction <maximumf>, %13, %cst_11 [1] : vector<2x6xf32> to vector<2xf32>
    %15 = vector.shape_cast %14 : vector<2xf32> to vector<2x1xf32>
    %16 = vector.broadcast %15 : vector<2x1xf32> to vector<2x6xf32>
    %17 = arith.subf %13, %16 : vector<2x6xf32>
    %18 = math.exp %17 : vector<2x6xf32>
    %cst_12 = arith.constant dense<0.000000e+00> : vector<2xf32>
    %19 = vector.multi_reduction <add>, %18, %cst_12 [1] : vector<2x6xf32> to vector<2xf32>
    %20 = vector.shape_cast %19 : vector<2xf32> to vector<2x1xf32>
    %21 = math.log %20 : vector<2x1xf32>
    %22 = vector.broadcast %21 : vector<2x1xf32> to vector<2x6xf32>
    %23 = arith.subf %17, %22 : vector<2x6xf32>
    %c0_13 = arith.constant 0 : index
    %c0_14 = arith.constant 0 : index
    %24 = vector.load %arg5[%c0_13, %c0_14] : memref<2x6xf32, #tpu.memory_space<vmem>>, vector<2x6xf32>
    tpu.vector_store %arg5[%c0_13, %c0_14], %23 {strides = array<i32>} : memref<2x6xf32, #tpu.memory_space<vmem>>, vector<2x6xf32>,
    return
  }
}

</mosaic_0001>

<llo_original>
// kernel: tgcn_forward.1
$region0: #{tgcn_forward.1}
  #allocation0 [shape = 'u32[]', space=smem, size = 0x4, offset = 0x4, fixed_abs, tag = 'smem constant byte address 0x4 - core index']
  #allocation1 [shape = 'u32[144,128]{1,0:T(1,128)}', space=vmem, size = 0x12000, scoped, tag = 'internal scratch']
  %s0 = inlined_call_operand.vmem [shape: f32[2,240], index: 0, kind: input, shape index: {}]
  %s1 = inlined_call_operand.vmem [shape: bf16[240,1024], index: 1, kind: input, shape index: {}]
  %s2 = inlined_call_operand.vmem [shape: f32[1,1024], index: 2, kind: input, shape index: {}]
  %s3 = inlined_call_operand.vmem [shape: f32[1024,6], index: 3, kind: input, shape index: {}]
  %s4 = inlined_call_operand.vmem [shape: f32[1,6], index: 4, kind: input, shape index: {}]
  %s5 = inlined_call_operand.hbm [shape: f32[2,6], index: 5, kind: output, shape index: {}]
  %s6 = sld [smem:[#allocation0]]
  $region30: #{tgcn_forward.1} parent=0
    _
  %s8 = ssub.s32 1, %s6
  %s9 = scalar_select 0, %s8, %s6
  $region1: #{tgcn_forward.1} parent=0
    #allocation2 [shape = 'u8[1024]{0}', space=vmem, size = 0x400, scoped, tag = 'output window, operand 0, single buffered']
    #allocation3 [shape = 's32[1]{0}', space=sflag, size = 0x4, scoped, tag = 'scoped memory for tgcn_forward.1']
    %10 = vsyncpa [#allocation3], 0
    // Predicated region
    $region2: #{tgcn_forward.1} parent=1 // pred_check
      _
    $region3: #{tgcn_forward.1} parent=1 // pred_check_branch
      %12 = sbr.rel (0) target = $region5
    $region4: #{tgcn_forward.1} parent=1 // pred_region
      _
    $region5: #{tgcn_forward.1} parent=1 // pred_fallthru
      _
    // Predicated region
    $region6: #{tgcn_forward.1} parent=1 // pred_check
      _
    $region7: #{tgcn_forward.1} parent=1 // pred_check_branch
      %14 = sbr.rel (0) target = $region9
    $region8: #{tgcn_forward.1} parent=1 // pred_region
      _
    $region9: #{tgcn_forward.1} parent=1 // pred_fallthru
      _
    // Predicated region
    $region10: #{tgcn_forward.1} parent=1 // pred_check
      _
    $region11: #{tgcn_forward.1} parent=1 // pred_check_branch
      %16 = sbr.rel (0) target = $region13
    $region12: #{tgcn_forward.1} parent=1 // pred_region
      _
    $region13: #{tgcn_forward.1} parent=1 // pred_fallthru
      _
    // Predicated region
    $region14: #{tgcn_forward.1} parent=1 // pred_check
      _
    $region15: #{tgcn_forward.1} parent=1 // pred_check_branch
      %18 = sbr.rel (0) target = $region17
    $region16: #{tgcn_forward.1} parent=1 // pred_region
      _
    $region17: #{tgcn_forward.1} parent=1 // pred_fallthru
      _
    // Predicated region
    $region18: #{tgcn_forward.1} parent=1 // pred_check
      _
    $region19: #{tgcn_forward.1} parent=1 // pred_check_branch
      %20 = sbr.rel (0) target = $region21
    $region20: #{tgcn_forward.1} parent=1 // pred_region
      _
    $region21: #{tgcn_forward.1} parent=1 // pred_fallthru
      _
    %v22 = vld [vmem:[%s0] sm:$0xf]
    %v25 = vunpack.c.l.s4 1983009808
    %v26 = vunpack.c.0.s8 %v25
    %v27 = vlaneseq
    %v28 = vshrl.u32 %v27, 7
    %v29 = vsub.s32 %v26, %v28
    %v30 = vrot.slane %v22, %v29
    %v31 = vcombine.high %v30, %v30
    %v34 = vpack.c.bf16 %v30, %v30
    %v35 = vpack.c.bf16 %v31, %v31
    %v36 = vld [vmem:[%s1] sm:$0xff]
    %v37 = vld [vmem:[%s1 + $0x8] sm:$0xff]
    %v38 = vld [vmem:[%s1 + $0x10] sm:$0xff]
    %v39 = vld [vmem:[%s1 + $0x18] sm:$0xff]
    %v40 = vld [vmem:[%s1 + $0x20] sm:$0xff]
    %v41 = vld [vmem:[%s1 + $0x28] sm:$0xff]
    %v42 = vld [vmem:[%s1 + $0x30] sm:$0xff]
    %v43 = vld [vmem:[%s1 + $0x38] sm:$0xff]
    %v44 = vld [vmem:[%s1 + $0x40] sm:$0xff]
    %v45 = vld [vmem:[%s1 + $0x48] sm:$0xff]
    %v46 = vld [vmem:[%s1 + $0x50] sm:$0xff]
    %v47 = vld [vmem:[%s1 + $0x58] sm:$0xff]
    %v48 = vld [vmem:[%s1 + $0x60] sm:$0xff]
    %v49 = vld [vmem:[%s1 + $0x68] sm:$0xff]
    %v50 = vld [vmem:[%s1 + $0x70] sm:$0xff]
    %v51 = vld [vmem:[%s1 + $0x78] sm:$0xff]
    %v52 = vld [vmem:[%s1 + $0x80] sm:$0xff]
    %v53 = vld [vmem:[%s1 + $0x88] sm:$0xff]
    %v54 = vld [vmem:[%s1 + $0x90] sm:$0xff]
    %v55 = vld [vmem:[%s1 + $0x98] sm:$0xff]
    %v56 = vld [vmem:[%s1 + $0xa0] sm:$0xff]
    %v57 = vld [vmem:[%s1 + $0xa8] sm:$0xff]
    %v58 = vld [vmem:[%s1 + $0xb0] sm:$0xff]
    %v59 = vld [vmem:[%s1 + $0xb8] sm:$0xff]
    %v60 = vld [vmem:[%s1 + $0xc0] sm:$0xff]
    %v61 = vld [vmem:[%s1 + $0xc8] sm:$0xff]
    %v62 = vld [vmem:[%s1 + $0xd0] sm:$0xff]
    %v63 = vld [vmem:[%s1 + $0xd8] sm:$0xff]
    %v64 = vld [vmem:[%s1 + $0xe0] sm:$0xff]
    %v65 = vld [vmem:[%s1 + $0xe8] sm:$0xff]
    %v66 = vld [vmem:[%s1 + $0xf0] sm:$0xff]
    %v67 = vld [vmem:[%s1 + $0xf8] sm:$0xff]
    %v68 = vld [vmem:[%s1 + $0x100] sm:$0xff]
    %v69 = vld [vmem:[%s1 + $0x108] sm:$0xff]
    %v70 = vld [vmem:[%s1 + $0x110] sm:$0xff]
    %v71 = vld [vmem:[%s1 + $0x118] sm:$0xff]
    %v72 = vld [vmem:[%s1 + $0x120] sm:$0xff]
    %v73 = vld [vmem:[%s1 + $0x128] sm:$0xff]
    %v74 = vld [vmem:[%s1 + $0x130] sm:$0xff]
    %v75 = vld [vmem:[%s1 + $0x138] sm:$0xff]
    %v76 = vld [vmem:[%s1 + $0x140] sm:$0xff]
    %v77 = vld [vmem:[%s1 + $0x148] sm:$0xff]
    %v78 = vld [vmem:[%s1 + $0x150] sm:$0xff]
    %v79 = vld [vmem:[%s1 + $0x158] sm:$0xff]
    %v80 = vld [vmem:[%s1 + $0x160] sm:$0xff]
    %v81 = vld [vmem:[%s1 + $0x168] sm:$0xff]
    %v82 = vld [vmem:[%s1 + $0x170] sm:$0xff]
    %v83 = vld [vmem:[%s1 + $0x178] sm:$0xff]
    %v84 = vld [vmem:[%s1 + $0x180] sm:$0xff]
    %v85 = vld [vmem:[%s1 + $0x188] sm:$0xff]
    %v86 = vld [vmem:[%s1 + $0x190] sm:$0xff]
    %v87 = vld [vmem:[%s1 + $0x198] sm:$0xff]
    %v88 = vld [vmem:[%s1 + $0x1a0] sm:$0xff]
    %v89 = vld [vmem:[%s1 + $0x1a8] sm:$0xff]
    %v90 = vld [vmem:[%s1 + $0x1b0] sm:$0xff]
    %v91 = vld [vmem:[%s1 + $0x1b8] sm:$0xff]
    %v92 = vld [vmem:[%s1 + $0x1c0] sm:$0xff]
    %v93 = vld [vmem:[%s1 + $0x1c8] sm:$0xff]
    %v94 = vld [vmem:[%s1 + $0x1d0] sm:$0xff]
    %v95 = vld [vmem:[%s1 + $0x1d8] sm:$0xff]
    %v96 = vld [vmem:[%s1 + $0x1e0] sm:$0xff]
    %v97 = vld [vmem:[%s1 + $0x1e8] sm:$0xff]
    %v98 = vld [vmem:[%s1 + $0x1f0] sm:$0xff]
    %v99 = vld [vmem:[%s1 + $0x1f8] sm:$0xff]
    %v100 = vld [vmem:[%s1 + $0x200] sm:$0xff]
    %v101 = vld [vmem:[%s1 + $0x208] sm:$0xff]
    %v102 = vld [vmem:[%s1 + $0x210] sm:$0xff]
    %v103 = vld [vmem:[%s1 + $0x218] sm:$0xff]
    %v104 = vld [vmem:[%s1 + $0x220] sm:$0xff]
    %v105 = vld [vmem:[%s1 + $0x228] sm:$0xff]
    %v106 = vld [vmem:[%s1 + $0x230] sm:$0xff]
    %v107 = vld [vmem:[%s1 + $0x238] sm:$0xff]
    %v108 = vld [vmem:[%s1 + $0x240] sm:$0xff]
    %v109 = vld [vmem:[%s1 + $0x248] sm:$0xff]
    %v110 = vld [vmem:[%s1 + $0x250] sm:$0xff]
    %v111 = vld [vmem:[%s1 + $0x258] sm:$0xff]
    %v112 = vld [vmem:[%s1 + $0x260] sm:$0xff]
    %v113 = vld [vmem:[%s1 + $0x268] sm:$0xff]
    %v114 = vld [vmem:[%s1 + $0x270] sm:$0xff]
    %v115 = vld [vmem:[%s1 + $0x278] sm:$0xff]
    %v116 = vld [vmem:[%s1 + $0x280] sm:$0xff]
    %v117 = vld [vmem:[%s1 + $0x288] sm:$0xff]
    %v118 = vld [vmem:[%s1 + $0x290] sm:$0xff]
    %v119 = vld [vmem:[%s1 + $0x298] sm:$0xff]
    %v120 = vld [vmem:[%s1 + $0x2a0] sm:$0xff]
    %v121 = vld [vmem:[%s1 + $0x2a8] sm:$0xff]
    %v122 = vld [vmem:[%s1 + $0x2b0] sm:$0xff]
    %v123 = vld [vmem:[%s1 + $0x2b8] sm:$0xff]
    %v124 = vld [vmem:[%s1 + $0x2c0] sm:$0xff]
    %v125 = vld [vmem:[%s1 + $0x2c8] sm:$0xff]
    %v126 = vld [vmem:[%s1 + $0x2d0] sm:$0xff]
    %v127 = vld [vmem:[%s1 + $0x2d8] sm:$0xff]
    %v128 = vld [vmem:[%s1 + $0x2e0] sm:$0xff]
    %v129 = vld [vmem:[%s1 + $0x2e8] sm:$0xff]
    %v130 = vld [vmem:[%s1 + $0x2f0] sm:$0xff]
    %v131 = vld [vmem:[%s1 + $0x2f8] sm:$0xff]
    %v132 = vld [vmem:[%s1 + $0x300] sm:$0xff]
    %v133 = vld [vmem:[%s1 + $0x308] sm:$0xff]
    %v134 = vld [vmem:[%s1 + $0x310] sm:$0xff]
    %v135 = vld [vmem:[%s1 + $0x318] sm:$0xff]
    %v136 = vld [vmem:[%s1 + $0x320] sm:$0xff]
    %v137 = vld [vmem:[%s1 + $0x328] sm:$0xff]
    %v138 = vld [vmem:[%s1 + $0x330] sm:$0xff]
    %v139 = vld [vmem:[%s1 + $0x338] sm:$0xff]
    %v140 = vld [vmem:[%s1 + $0x340] sm:$0xff]
    %v141 = vld [vmem:[%s1 + $0x348] sm:$0xff]
    %v142 = vld [vmem:[%s1 + $0x350] sm:$0xff]
    %v143 = vld [vmem:[%s1 + $0x358] sm:$0xff]
    %v144 = vld [vmem:[%s1 + $0x360] sm:$0xff]
    %v145 = vld [vmem:[%s1 + $0x368] sm:$0xff]
    %v146 = vld [vmem:[%s1 + $0x370] sm:$0xff]
    %v147 = vld [vmem:[%s1 + $0x378] sm:$0xff]
    %v148 = vld [vmem:[%s1 + $0x380] sm:$0xff]
    %v149 = vld [vmem:[%s1 + $0x388] sm:$0xff]
    %v150 = vld [vmem:[%s1 + $0x390] sm:$0xff]
    %v151 = vld [vmem:[%s1 + $0x398] sm:$0xff]
    %v152 = vld [vmem:[%s1 + $0x3a0] sm:$0xff]
    %v153 = vld [vmem:[%s1 + $0x3a8] sm:$0xff]
    %v154 = vld [vmem:[%s1 + $0x3b0] sm:$0xff]
    %v155 = vld [vmem:[%s1 + $0x3b8] sm:$0xff]
    %v156 = vld [vmem:[%s2] sm:$0xff]
    %v158 = vlaneseq
    %v159 = vshrl.u32 %v158, 7
    %v160 = vsub.s32 0, %v159
    %v161 = vrot.slane %v156, %v160
    %v162 = vlaneseq
    %v163 = vshrl.u32 %v162, 7
    %v164 = vsub.s32 1, %v163
    %v165 = vrot.slane %v156, %v164
    %v166 = vlaneseq
    %v167 = vshrl.u32 %v166, 7
    %v168 = vsub.s32 2, %v167
    %v169 = vrot.slane %v156, %v168
    %v170 = vlaneseq
    %v171 = vshrl.u32 %v170, 7
    %v172 = vsub.s32 3, %v171
    %v173 = vrot.slane %v156, %v172
    %v174 = vlaneseq
    %v175 = vshrl.u32 %v174, 7
    %v176 = vsub.s32 4, %v175
    %v177 = vrot.slane %v156, %v176
    %v178 = vlaneseq
    %v179 = vshrl.u32 %v178, 7
    %v180 = vsub.s32 5, %v179
    %v181 = vrot.slane %v156, %v180
    %v182 = vlaneseq
    %v183 = vshrl.u32 %v182, 7
    %v184 = vsub.s32 6, %v183
    %v185 = vrot.slane %v156, %v184
    %v186 = vlaneseq
    %v187 = vshrl.u32 %v186, 7
    %v188 = vsub.s32 7, %v187
    %v189 = vrot.slane %v156, %v188
    %v318 = vunpack.c.l.b16 %v36
    %v319 = vunpack.c.h.b16 %v36
    %v320 = vunpack.c.l.b16 %v37
    %v321 = vunpack.c.h.b16 %v37
    %v322 = vunpack.c.l.b16 %v38
    %v323 = vunpack.c.h.b16 %v38
    %v324 = vunpack.c.l.b16 %v39
    %v325 = vunpack.c.h.b16 %v39
    %v326 = vunpack.c.l.b16 %v40
    %v327 = vunpack.c.h.b16 %v40
    %v328 = vunpack.c.l.b16 %v41
    %v329 = vunpack.c.h.b16 %v41
    %v330 = vunpack.c.l.b16 %v42
    %v331 = vunpack.c.h.b16 %v42
    %v332 = vunpack.c.l.b16 %v43
    %v333 = vunpack.c.h.b16 %v43
    %v334 = vunpack.c.l.b16 %v44
    %v335 = vunpack.c.h.b16 %v44
    %v336 = vunpack.c.l.b16 %v45
    %v337 = vunpack.c.h.b16 %v45
    %v338 = vunpack.c.l.b16 %v46
    %v339 = vunpack.c.h.b16 %v46
    %v340 = vunpack.c.l.b16 %v47
    %v341 = vunpack.c.h.b16 %v47
    %v342 = vunpack.c.l.b16 %v48
    %v343 = vunpack.c.h.b16 %v48
    %v344 = vunpack.c.l.b16 %v49
    %v345 = vunpack.c.h.b16 %v49
    %v346 = vunpack.c.l.b16 %v50
    %v347 = vunpack.c.h.b16 %v50
    %v348 = vunpack.c.l.b16 %v51
    %v349 = vunpack.c.h.b16 %v51
    %v350 = vunpack.c.l.b16 %v52
    %v351 = vunpack.c.h.b16 %v52
    %v352 = vunpack.c.l.b16 %v53
    %v353 = vunpack.c.h.b16 %v53
    %v354 = vunpack.c.l.b16 %v54
    %v355 = vunpack.c.h.b16 %v54
    %v356 = vunpack.c.l.b16 %v55
    %v357 = vunpack.c.h.b16 %v55
    %v358 = vunpack.c.l.b16 %v56
    %v359 = vunpack.c.h.b16 %v56
    %v360 = vunpack.c.l.b16 %v57
    %v361 = vunpack.c.h.b16 %v57
    %v362 = vunpack.c.l.b16 %v58
    %v363 = vunpack.c.h.b16 %v58
    %v364 = vunpack.c.l.b16 %v59
    %v365 = vunpack.c.h.b16 %v59
    %v366 = vunpack.c.l.b16 %v60
    %v367 = vunpack.c.h.b16 %v60
    %v368 = vunpack.c.l.b16 %v61
    %v369 = vunpack.c.h.b16 %v61
    %v370 = vunpack.c.l.b16 %v62
    %v371 = vunpack.c.h.b16 %v62
    %v372 = vunpack.c.l.b16 %v63
    %v373 = vunpack.c.h.b16 %v63
    %v374 = vunpack.c.l.b16 %v64
    %v375 = vunpack.c.h.b16 %v64
    %v376 = vunpack.c.l.b16 %v65
    %v377 = vunpack.c.h.b16 %v65
    %v378 = vunpack.c.l.b16 %v66
    %v379 = vunpack.c.h.b16 %v66
    %v380 = vunpack.c.l.b16 %v67
    %v381 = vunpack.c.h.b16 %v67
    %v382 = vunpack.c.l.b16 %v68
    %v383 = vunpack.c.h.b16 %v68
    %v384 = vunpack.c.l.b16 %v69
    %v385 = vunpack.c.h.b16 %v69
    %v386 = vunpack.c.l.b16 %v70
    %v387 = vunpack.c.h.b16 %v70
    %v388 = vunpack.c.l.b16 %v71
    %v389 = vunpack.c.h.b16 %v71
    %v390 = vunpack.c.l.b16 %v72
    %v391 = vunpack.c.h.b16 %v72
    %v392 = vunpack.c.l.b16 %v73
    %v393 = vunpack.c.h.b16 %v73
    %v394 = vunpack.c.l.b16 %v74
    %v395 = vunpack.c.h.b16 %v74
    %v396 = vunpack.c.l.b16 %v75
    %v397 = vunpack.c.h.b16 %v75
    %v398 = vunpack.c.l.b16 %v76
    %v399 = vunpack.c.h.b16 %v76
    %v400 = vunpack.c.l.b16 %v77
    %v401 = vunpack.c.h.b16 %v77
    %v402 = vunpack.c.l.b16 %v78
    %v403 = vunpack.c.h.b16 %v78
    %v404 = vunpack.c.l.b16 %v79
    %v405 = vunpack.c.h.b16 %v79
    %v406 = vunpack.c.l.b16 %v80
    %v407 = vunpack.c.h.b16 %v80
    %v408 = vunpack.c.l.b16 %v81
    %v409 = vunpack.c.h.b16 %v81
    %v410 = vunpack.c.l.b16 %v82
    %v411 = vunpack.c.h.b16 %v82
    %v412 = vunpack.c.l.b16 %v83
    %v413 = vunpack.c.h.b16 %v83
    %v414 = vunpack.c.l.b16 %v84
    %v415 = vunpack.c.h.b16 %v84
    %v416 = vunpack.c.l.b16 %v85
    %v417 = vunpack.c.h.b16 %v85
    %v418 = vunpack.c.l.b16 %v86
    %v419 = vunpack.c.h.b16 %v86
    %v420 = vunpack.c.l.b16 %v87
    %v421 = vunpack.c.h.b16 %v87
    %v422 = vunpack.c.l.b16 %v88
    %v423 = vunpack.c.h.b16 %v88
    %v424 = vunpack.c.l.b16 %v89
    %v425 = vunpack.c.h.b16 %v89
    %v426 = vunpack.c.l.b16 %v90
    %v427 = vunpack.c.h.b16 %v90
    %v428 = vunpack.c.l.b16 %v91
    %v429 = vunpack.c.h.b16 %v91
    %v430 = vunpack.c.l.b16 %v92
    %v431 = vunpack.c.h.b16 %v92
    %v432 = vunpack.c.l.b16 %v93
    %v433 = vunpack.c.h.b16 %v93
    %v434 = vunpack.c.l.b16 %v94
    %v435 = vunpack.c.h.b16 %v94
    %v436 = vunpack.c.l.b16 %v95
    %v437 = vunpack.c.h.b16 %v95
    %v438 = vunpack.c.l.b16 %v96
    %v439 = vunpack.c.h.b16 %v96
    %v440 = vunpack.c.l.b16 %v97
    %v441 = vunpack.c.h.b16 %v97
    %v442 = vunpack.c.l.b16 %v98
    %v443 = vunpack.c.h.b16 %v98
    %v444 = vunpack.c.l.b16 %v99
    %v445 = vunpack.c.h.b16 %v99
    %v446 = vunpack.c.l.b16 %v100
    %v447 = vunpack.c.h.b16 %v100
    %v448 = vunpack.c.l.b16 %v101
    %v449 = vunpack.c.h.b16 %v101
    %v450 = vunpack.c.l.b16 %v102
    %v451 = vunpack.c.h.b16 %v102
    %v452 = vunpack.c.l.b16 %v103
    %v453 = vunpack.c.h.b16 %v103
    %v454 = vunpack.c.l.b16 %v104
    %v455 = vunpack.c.h.b16 %v104
    %v456 = vunpack.c.l.b16 %v105
    %v457 = vunpack.c.h.b16 %v105
    %v458 = vunpack.c.l.b16 %v106
    %v459 = vunpack.c.h.b16 %v106
    %v460 = vunpack.c.l.b16 %v107
    %v461 = vunpack.c.h.b16 %v107
    %v462 = vunpack.c.l.b16 %v108
    %v463 = vunpack.c.h.b16 %v108
    %v464 = vunpack.c.l.b16 %v109
    %v465 = vunpack.c.h.b16 %v109
    %v466 = vunpack.c.l.b16 %v110
    %v467 = vunpack.c.h.b16 %v110
    %v468 = vunpack.c.l.b16 %v111
    %v469 = vunpack.c.h.b16 %v111
    %v470 = vunpack.c.l.b16 %v112
    %v471 = vunpack.c.h.b16 %v112
    %v472 = vunpack.c.l.b16 %v113
    %v473 = vunpack.c.h.b16 %v113
    %v474 = vunpack.c.l.b16 %v114
    %v475 = vunpack.c.h.b16 %v114
    %v476 = vunpack.c.l.b16 %v115
    %v477 = vunpack.c.h.b16 %v115
    %v478 = vunpack.c.l.b16 %v116
    %v479 = vunpack.c.h.b16 %v116
    %v480 = vunpack.c.l.b16 %v117
    %v481 = vunpack.c.h.b16 %v117
    %v482 = vunpack.c.l.b16 %v118
    %v483 = vunpack.c.h.b16 %v118
    %v484 = vunpack.c.l.b16 %v119
    %v485 = vunpack.c.h.b16 %v119
    %v486 = vunpack.c.l.b16 %v120
    %v487 = vunpack.c.h.b16 %v120
    %v488 = vunpack.c.l.b16 %v121
    %v489 = vunpack.c.h.b16 %v121
    %v490 = vunpack.c.l.b16 %v122
    %v491 = vunpack.c.h.b16 %v122
    %v492 = vunpack.c.l.b16 %v123
    %v493 = vunpack.c.h.b16 %v123
    %v494 = vunpack.c.l.b16 %v124
    %v495 = vunpack.c.h.b16 %v124
    %v496 = vunpack.c.l.b16 %v125
    %v497 = vunpack.c.h.b16 %v125
    %v498 = vunpack.c.l.b16 %v126
    %v499 = vunpack.c.h.b16 %v126
    %v500 = vunpack.c.l.b16 %v127
    %v501 = vunpack.c.h.b16 %v127
    %v502 = vunpack.c.l.b16 %v128
    %v503 = vunpack.c.h.b16 %v128
    %v504 = vunpack.c.l.b16 %v129
    %v505 = vunpack.c.h.b16 %v129
    %v506 = vunpack.c.l.b16 %v130
    %v507 = vunpack.c.h.b16 %v130
    %v508 = vunpack.c.l.b16 %v131
    %v509 = vunpack.c.h.b16 %v131
    %v510 = vunpack.c.l.b16 %v132
    %v511 = vunpack.c.h.b16 %v132
    %v512 = vunpack.c.l.b16 %v133
    %v513 = vunpack.c.h.b16 %v133
    %v514 = vunpack.c.l.b16 %v134
    %v515 = vunpack.c.h.b16 %v134
    %v516 = vunpack.c.l.b16 %v135
    %v517 = vunpack.c.h.b16 %v135
    %v518 = vunpack.c.l.b16 %v136
    %v519 = vunpack.c.h.b16 %v136
    %v520 = vunpack.c.l.b16 %v137
    %v521 = vunpack.c.h.b16 %v137
    %v522 = vunpack.c.l.b16 %v138
    %v523 = vunpack.c.h.b16 %v138
    %v524 = vunpack.c.l.b16 %v139
    %v525 = vunpack.c.h.b16 %v139
    %v526 = vunpack.c.l.b16 %v140
    %v527 = vunpack.c.h.b16 %v140
    %v528 = vunpack.c.l.b16 %v141
    %v529 = vunpack.c.h.b16 %v141
    %v530 = vunpack.c.l.b16 %v142
    %v531 = vunpack.c.h.b16 %v142
    %v532 = vunpack.c.l.b16 %v143
    %v533 = vunpack.c.h.b16 %v143
    %v534 = vunpack.c.l.b16 %v144
    %v535 = vunpack.c.h.b16 %v144
    %v536 = vunpack.c.l.b16 %v145
    %v537 = vunpack.c.h.b16 %v145
    %v538 = vunpack.c.l.b16 %v146
    %v539 = vunpack.c.h.b16 %v146
    %v540 = vunpack.c.l.b16 %v147
    %v541 = vunpack.c.h.b16 %v147
    %v542 = vunpack.c.l.b16 %v148
    %v543 = vunpack.c.h.b16 %v148
    %v544 = vunpack.c.l.b16 %v149
    %v545 = vunpack.c.h.b16 %v149
    %v546 = vunpack.c.l.b16 %v150
    %v547 = vunpack.c.h.b16 %v150
    %v548 = vunpack.c.l.b16 %v151
    %v549 = vunpack.c.h.b16 %v151
    %v550 = vunpack.c.l.b16 %v152
    %v551 = vunpack.c.h.b16 %v152
    %v552 = vunpack.c.l.b16 %v153
    %v553 = vunpack.c.h.b16 %v153
    %v554 = vunpack.c.l.b16 %v154
    %v555 = vunpack.c.h.b16 %v154
    %v556 = vunpack.c.l.b16 %v155
    %v557 = vunpack.c.h.b16 %v155
    %v558 = vpack.c.b16 %v326, %v318
    %v559 = vpack.c.b16 %v327, %v319
    %v560 = vpack.c.b16 %v328, %v320
    %v561 = vpack.c.b16 %v329, %v321
    %v562 = vpack.c.b16 %v330, %v322
    %v563 = vpack.c.b16 %v331, %v323
    %v564 = vpack.c.b16 %v332, %v324
    %v565 = vpack.c.b16 %v333, %v325
    %v566 = vpack.c.b16 %v342, %v334
    %v567 = vpack.c.b16 %v343, %v335
    %v568 = vpack.c.b16 %v344, %v336
    %v569 = vpack.c.b16 %v345, %v337
    %v570 = vpack.c.b16 %v346, %v338
    %v571 = vpack.c.b16 %v347, %v339
    %v572 = vpack.c.b16 %v348, %v340
    %v573 = vpack.c.b16 %v349, %v341
    %v574 = vpack.c.b16 %v358, %v350
    %v575 = vpack.c.b16 %v359, %v351
    %v576 = vpack.c.b16 %v360, %v352
    %v577 = vpack.c.b16 %v361, %v353
    %v578 = vpack.c.b16 %v362, %v354
    %v579 = vpack.c.b16 %v363, %v355
    %v580 = vpack.c.b16 %v364, %v356
    %v581 = vpack.c.b16 %v365, %v357
    %v582 = vpack.c.b16 %v374, %v366
    %v583 = vpack.c.b16 %v375, %v367
    %v584 = vpack.c.b16 %v376, %v368
    %v585 = vpack.c.b16 %v377, %v369
    %v586 = vpack.c.b16 %v378, %v370
    %v587 = vpack.c.b16 %v379, %v371
    %v588 = vpack.c.b16 %v380, %v372
    %v589 = vpack.c.b16 %v381, %v373
    %v590 = vpack.c.b16 %v390, %v382
    %v591 = vpack.c.b16 %v391, %v383
    %v592 = vpack.c.b16 %v392, %v384
    %v593 = vpack.c.b16 %v393, %v385
    %v594 = vpack.c.b16 %v394, %v386
    %v595 = vpack.c.b16 %v395, %v387
    %v596 = vpack.c.b16 %v396, %v388
    %v597 = vpack.c.b16 %v397, %v389
    %v598 = vpack.c.b16 %v406, %v398
    %v599 = vpack.c.b16 %v407, %v399
    %v600 = vpack.c.b16 %v408, %v400
    %v601 = vpack.c.b16 %v409, %v401
    %v602 = vpack.c.b16 %v410, %v402
    %v603 = vpack.c.b16 %v411, %v403
    %v604 = vpack.c.b16 %v412, %v404
    %v605 = vpack.c.b16 %v413, %v405
    %v606 = vpack.c.b16 %v422, %v414
    %v607 = vpack.c.b16 %v423, %v415
    %v608 = vpack.c.b16 %v424, %v416
    %v609 = vpack.c.b16 %v425, %v417
    %v610 = vpack.c.b16 %v426, %v418
    %v611 = vpack.c.b16 %v427, %v419
    %v612 = vpack.c.b16 %v428, %v420
    %v613 = vpack.c.b16 %v429, %v421
    %v614 = vpack.c.b16 %v438, %v430
    %v615 = vpack.c.b16 %v439, %v431
    %v616 = vpack.c.b16 %v440, %v432
    %v617 = vpack.c.b16 %v441, %v433
    %v618 = vpack.c.b16 %v442, %v434
    %v619 = vpack.c.b16 %v443, %v435
    %v620 = vpack.c.b16 %v444, %v436
    %v621 = vpack.c.b16 %v445, %v437
    %v622 = vpack.c.b16 %v454, %v446
    %v623 = vpack.c.b16 %v455, %v447
    %v624 = vpack.c.b16 %v456, %v448
    %v625 = vpack.c.b16 %v457, %v449
    %v626 = vpack.c.b16 %v458, %v450
    %v627 = vpack.c.b16 %v459, %v451
    %v628 = vpack.c.b16 %v460, %v452
    %v629 = vpack.c.b16 %v461, %v453
    %v630 = vpack.c.b16 %v470, %v462
    %v631 = vpack.c.b16 %v471, %v463
    %v632 = vpack.c.b16 %v472, %v464
    %v633 = vpack.c.b16 %v473, %v465
    %v634 = vpack.c.b16 %v474, %v466
    %v635 = vpack.c.b16 %v475, %v467
    %v636 = vpack.c.b16 %v476, %v468
    %v637 = vpack.c.b16 %v477, %v469
    %v638 = vpack.c.b16 %v486, %v478
    %v639 = vpack.c.b16 %v487, %v479
    %v640 = vpack.c.b16 %v488, %v480
    %v641 = vpack.c.b16 %v489, %v481
    %v642 = vpack.c.b16 %v490, %v482
    %v643 = vpack.c.b16 %v491, %v483
    %v644 = vpack.c.b16 %v492, %v484
    %v645 = vpack.c.b16 %v493, %v485
    %v646 = vpack.c.b16 %v502, %v494
    %v647 = vpack.c.b16 %v503, %v495
    %v648 = vpack.c.b16 %v504, %v496
    %v649 = vpack.c.b16 %v505, %v497
    %v650 = vpack.c.b16 %v506, %v498
    %v651 = vpack.c.b16 %v507, %v499
    %v652 = vpack.c.b16 %v508, %v500
    %v653 = vpack.c.b16 %v509, %v501
    %v654 = vpack.c.b16 %v518, %v510
    %v655 = vpack.c.b16 %v519, %v511
    %v656 = vpack.c.b16 %v520, %v512
    %v657 = vpack.c.b16 %v521, %v513
    %v658 = vpack.c.b16 %v522, %v514
    %v659 = vpack.c.b16 %v523, %v515
    %v660 = vpack.c.b16 %v524, %v516
    %v661 = vpack.c.b16 %v525, %v517
    %v662 = vpack.c.b16 %v534, %v526
    %v663 = vpack.c.b16 %v535, %v527
    %v664 = vpack.c.b16 %v536, %v528
    %v665 = vpack.c.b16 %v537, %v529
    %v666 = vpack.c.b16 %v538, %v530
    %v667 = vpack.c.b16 %v539, %v531
    %v668 = vpack.c.b16 %v540, %v532
    %v669 = vpack.c.b16 %v541, %v533
    %v670 = vpack.c.b16 %v550, %v542
    %v671 = vpack.c.b16 %v551, %v543
    %v672 = vpack.c.b16 %v552, %v544
    %v673 = vpack.c.b16 %v553, %v545
    %v674 = vpack.c.b16 %v554, %v546
    %v675 = vpack.c.b16 %v555, %v547
    %v676 = vpack.c.b16 %v556, %v548
    %v677 = vpack.c.b16 %v557, %v549
    %vm798 = vcmask 916480
    %v800 = vsel %vm798, %v35, 0
    %802 = vmatprep.subr.bf16.mxu0 %v559
    %803 = vmatpush1.bf16.msra.mxu0 %v558
    %804 = vmatprep.subr.bf16.mxu0 %v567
    %805 = vmatpush1.bf16.msra.mxu0 %v566
    %806 = vmatprep.subr.bf16.mxu0 %v575
    %807 = vmatpush1.bf16.msra.mxu0 %v574
    %808 = vmatprep.subr.bf16.mxu0 %v583
    %809 = vmatpush1.bf16.msra.mxu0 %v582
    %810 = vmatprep.subr.bf16.mxu0 %v591
    %811 = vmatpush1.bf16.msra.mxu0 %v590
    %812 = vmatprep.subr.bf16.mxu0 %v599
    %813 = vmatpush1.bf16.msra.mxu0 %v598
    %814 = vmatprep.subr.bf16.mxu0 %v607
    %815 = vmatpush1.bf16.msra.mxu0 %v606
    %816 = vmatprep.subr.bf16.mxu0 %v615
    %817 = vmatpush1.bf16.msra.mxu0 %v614
    %818 = vmatprep.subr.bf16.mxu0 %v623
    %819 = vmatpush1.bf16.msra.mxu0 %v622
    %820 = vmatprep.subr.bf16.mxu0 %v631
    %821 = vmatpush1.bf16.msra.mxu0 %v630
    %822 = vmatprep.subr.bf16.mxu0 %v639
    %823 = vmatpush1.bf16.msra.mxu0 %v638
    %824 = vmatprep.subr.bf16.mxu0 %v647
    %825 = vmatpush1.bf16.msra.mxu0 %v646
    %826 = vmatprep.subr.bf16.mxu0 %v655
    %827 = vmatpush1.bf16.msra.mxu0 %v654
    %828 = vmatprep.subr.bf16.mxu0 %v663
    %829 = vmatpush1.bf16.msra.mxu0 %v662
    %830 = vmatprep.subr.bf16.mxu0 %v671
    %831 = vmatpush1.bf16.msra.mxu0 %v670
    %832 = vmatprep.subr.bf16.mxu0 0
    %833 = vmatpush1.bf16.msra.mxu0 0
    %834 = vmatprep.mubr.bf16.mxu0 %v800
    %835 = vmatmul.mubr.bf16.gmra.mrb[0].mxu0 %v34
    %v836 = vpop.f32.mrb[0].mxu0
    %v837 = vadd.f32 %v161, %v836
    %v838 = vpop.f32.mrb[0].mxu0
    %v839 = vadd.f32 %v165, %v838
    %v840 = vpop.f32.mrb[0].mxu0
    %v841 = vpop.f32.mrb[0].mxu0
    %842 = vdwg.mxu0
    %843 = vmatprep.subr.bf16.mxu0 %v561
    %844 = vmatpush1.bf16.msra.mxu0 %v560
    %845 = vmatprep.subr.bf16.mxu0 %v569
    %846 = vmatpush1.bf16.msra.mxu0 %v568
    %847 = vmatprep.subr.bf16.mxu0 %v577
    %848 = vmatpush1.bf16.msra.mxu0 %v576
    %849 = vmatprep.subr.bf16.mxu0 %v585
    %850 = vmatpush1.bf16.msra.mxu0 %v584
    %851 = vmatprep.subr.bf16.mxu0 %v593
    %852 = vmatpush1.bf16.msra.mxu0 %v592
    %853 = vmatprep.subr.bf16.mxu0 %v601
    %854 = vmatpush1.bf16.msra.mxu0 %v600
    %855 = vmatprep.subr.bf16.mxu0 %v609
    %856 = vmatpush1.bf16.msra.mxu0 %v608
    %857 = vmatprep.subr.bf16.mxu0 %v617
    %858 = vmatpush1.bf16.msra.mxu0 %v616
    %859 = vmatprep.subr.bf16.mxu0 %v625
    %860 = vmatpush1.bf16.msra.mxu0 %v624
    %861 = vmatprep.subr.bf16.mxu0 %v633
    %862 = vmatpush1.bf16.msra.mxu0 %v632
    %863 = vmatprep.subr.bf16.mxu0 %v641
    %864 = vmatpush1.bf16.msra.mxu0 %v640
    %865 = vmatprep.subr.bf16.mxu0 %v649
    %866 = vmatpush1.bf16.msra.mxu0 %v648
    %867 = vmatprep.subr.bf16.mxu0 %v657
    %868 = vmatpush1.bf16.msra.mxu0 %v656
    %869 = vmatprep.subr.bf16.mxu0 %v665
    %870 = vmatpush1.bf16.msra.mxu0 %v664
    %871 = vmatprep.subr.bf16.mxu0 %v673
    %872 = vmatpush1.bf16.msra.mxu0 %v672
    %873 = vmatprep.subr.bf16.mxu0 0
    %874 = vmatpush1.bf16.msra.mxu0 0
    %875 = vmatprep.mubr.bf16.mxu0 %v800
    %876 = vmatmul.mubr.bf16.gmra.mrb[0].mxu0 %v34
    %v877 = vpop.f32.mrb[0].mxu0
    %v878 = vadd.f32 %v169, %v877
    %v879 = vpop.f32.mrb[0].mxu0
    %v880 = vadd.f32 %v173, %v879
    %v881 = vpop.f32.mrb[0].mxu0
    %v882 = vpop.f32.mrb[0].mxu0
    %883 = vdwg.mxu0
    %884 = vmatprep.subr.bf16.mxu0 %v563
    %885 = vmatpush1.bf16.msra.mxu0 %v562
    %886 = vmatprep.subr.bf16.mxu0 %v571
    %887 = vmatpush1.bf16.msra.mxu0 %v570
    %888 = vmatprep.subr.bf16.mxu0 %v579
    %889 = vmatpush1.bf16.msra.mxu0 %v578
    %890 = vmatprep.subr.bf16.mxu0 %v587
    %891 = vmatpush1.bf16.msra.mxu0 %v586
    %892 = vmatprep.subr.bf16.mxu0 %v595
    %893 = vmatpush1.bf16.msra.mxu0 %v594
    %894 = vmatprep.subr.bf16.mxu0 %v603
    %895 = vmatpush1.bf16.msra.mxu0 %v602
    %896 = vmatprep.subr.bf16.mxu0 %v611
    %897 = vmatpush1.bf16.msra.mxu0 %v610
    %898 = vmatprep.subr.bf16.mxu0 %v619
    %899 = vmatpush1.bf16.msra.mxu0 %v618
    %900 = vmatprep.subr.bf16.mxu0 %v627
    %901 = vmatpush1.bf16.msra.mxu0 %v626
    %902 = vmatprep.subr.bf16.mxu0 %v635
    %903 = vmatpush1.bf16.msra.mxu0 %v634
    %904 = vmatprep.subr.bf16.mxu0 %v643
    %905 = vmatpush1.bf16.msra.mxu0 %v642
    %906 = vmatprep.subr.bf16.mxu0 %v651
    %907 = vmatpush1.bf16.msra.mxu0 %v650
    %908 = vmatprep.subr.bf16.mxu0 %v659
    %909 = vmatpush1.bf16.msra.mxu0 %v658
    %910 = vmatprep.subr.bf16.mxu0 %v667
    %911 = vmatpush1.bf16.msra.mxu0 %v666
    %912 = vmatprep.subr.bf16.mxu0 %v675
    %913 = vmatpush1.bf16.msra.mxu0 %v674
    %914 = vmatprep.subr.bf16.mxu0 0
    %915 = vmatpush1.bf16.msra.mxu0 0
    %916 = vmatprep.mubr.bf16.mxu0 %v800
    %917 = vmatmul.mubr.bf16.gmra.mrb[0].mxu0 %v34
    %v918 = vpop.f32.mrb[0].mxu0
    %v919 = vadd.f32 %v177, %v918
    %v920 = vpop.f32.mrb[0].mxu0
    %v921 = vadd.f32 %v181, %v920
    %v922 = vpop.f32.mrb[0].mxu0
    %v923 = vpop.f32.mrb[0].mxu0
    %924 = vdwg.mxu0
    %925 = vmatprep.subr.bf16.mxu0 %v565
    %926 = vmatpush1.bf16.msra.mxu0 %v564
    %927 = vmatprep.subr.bf16.mxu0 %v573
    %928 = vmatpush1.bf16.msra.mxu0 %v572
    %929 = vmatprep.subr.bf16.mxu0 %v581
    %930 = vmatpush1.bf16.msra.mxu0 %v580
    %931 = vmatprep.subr.bf16.mxu0 %v589
    %932 = vmatpush1.bf16.msra.mxu0 %v588
    %933 = vmatprep.subr.bf16.mxu0 %v597
    %934 = vmatpush1.bf16.msra.mxu0 %v596
    %935 = vmatprep.subr.bf16.mxu0 %v605
    %936 = vmatpush1.bf16.msra.mxu0 %v604
    %937 = vmatprep.subr.bf16.mxu0 %v613
    %938 = vmatpush1.bf16.msra.mxu0 %v612
    %939 = vmatprep.subr.bf16.mxu0 %v621
    %940 = vmatpush1.bf16.msra.mxu0 %v620
    %941 = vmatprep.subr.bf16.mxu0 %v629
    %942 = vmatpush1.bf16.msra.mxu0 %v628
    %943 = vmatprep.subr.bf16.mxu0 %v637
    %944 = vmatpush1.bf16.msra.mxu0 %v636
    %945 = vmatprep.subr.bf16.mxu0 %v645
    %946 = vmatpush1.bf16.msra.mxu0 %v644
    %947 = vmatprep.subr.bf16.mxu0 %v653
    %948 = vmatpush1.bf16.msra.mxu0 %v652
    %949 = vmatprep.subr.bf16.mxu0 %v661
    %950 = vmatpush1.bf16.msra.mxu0 %v660
    %951 = vmatprep.subr.bf16.mxu0 %v669
    %952 = vmatpush1.bf16.msra.mxu0 %v668
    %953 = vmatprep.subr.bf16.mxu0 %v677
    %954 = vmatpush1.bf16.msra.mxu0 %v676
    %955 = vmatprep.subr.bf16.mxu0 0
    %956 = vmatpush1.bf16.msra.mxu0 0
    %957 = vmatprep.mubr.bf16.mxu0 %v800
    %958 = vmatmul.mubr.bf16.gmra.mrb[0].mxu0 %v34
    %v959 = vpop.f32.mrb[0].mxu0
    %v960 = vadd.f32 %v185, %v959
    %v961 = vpop.f32.mrb[0].mxu0
    %v962 = vadd.f32 %v189, %v961
    %v963 = vpop.f32.mrb[0].mxu0
    %v964 = vpop.f32.mrb[0].mxu0
    %965 = vdwg.mxu0
    %v966 = vmax.f32 %v837, 0.0
    %v967 = vmax.f32 %v839, 0.0
    %v968 = vmax.f32 %v878, 0.0
    %v969 = vmax.f32 %v880, 0.0
    %v970 = vmax.f32 %v919, 0.0
    %v971 = vmax.f32 %v921, 0.0
    %v972 = vmax.f32 %v960, 0.0
    %v973 = vmax.f32 %v962, 0.0
    %v974 = vld [vmem:[%s3] sm:$0xff]
    %v975 = vld [vmem:[%s3 + $0x8] sm:$0xff]
    %v976 = vld [vmem:[%s3 + $0x10] sm:$0xff]
    %v977 = vld [vmem:[%s3 + $0x18] sm:$0xff]
    %v978 = vld [vmem:[%s3 + $0x20] sm:$0xff]
    %v979 = vld [vmem:[%s3 + $0x28] sm:$0xff]
    %v980 = vld [vmem:[%s3 + $0x30] sm:$0xff]
    %v981 = vld [vmem:[%s3 + $0x38] sm:$0xff]
    %v982 = vld [vmem:[%s3 + $0x40] sm:$0xff]
    %v983 = vld [vmem:[%s3 + $0x48] sm:$0xff]
    %v984 = vld [vmem:[%s3 + $0x50] sm:$0xff]
    %v985 = vld [vmem:[%s3 + $0x58] sm:$0xff]
    %v986 = vld [vmem:[%s3 + $0x60] sm:$0xff]
    %v987 = vld [vmem:[%s3 + $0x68] sm:$0xff]
    %v988 = vld [vmem:[%s3 + $0x70] sm:$0xff]
    %v989 = vld [vmem:[%s3 + $0x78] sm:$0xff]
    %v990 = vld [vmem:[%s3 + $0x80] sm:$0xff]
    %v991 = vld [vmem:[%s3 + $0x88] sm:$0xff]
    %v992 = vld [vmem:[%s3 + $0x90] sm:$0xff]
    %v993 = vld [vmem:[%s3 + $0x98] sm:$0xff]
    %v994 = vld [vmem:[%s3 + $0xa0] sm:$0xff]
    %v995 = vld [vmem:[%s3 + $0xa8] sm:$0xff]
    %v996 = vld [vmem:[%s3 + $0xb0] sm:$0xff]
    %v997 = vld [vmem:[%s3 + $0xb8] sm:$0xff]
    %v998 = vld [vmem:[%s3 + $0xc0] sm:$0xff]
    %v999 = vld [vmem:[%s3 + $0xc8] sm:$0xff]
    %v1000 = vld [vmem:[%s3 + $0xd0] sm:$0xff]
    %v1001 = vld [vmem:[%s3 + $0xd8] sm:$0xff]
    %v1002 = vld [vmem:[%s3 + $0xe0] sm:$0xff]
    %v1003 = vld [vmem:[%s3 + $0xe8] sm:$0xff]
    %v1004 = vld [vmem:[%s3 + $0xf0] sm:$0xff]
    %v1005 = vld [vmem:[%s3 + $0xf8] sm:$0xff]
    %v1006 = vld [vmem:[%s3 + $0x100] sm:$0xff]
    %v1007 = vld [vmem:[%s3 + $0x108] sm:$0xff]
    %v1008 = vld [vmem:[%s3 + $0x110] sm:$0xff]
    %v1009 = vld [vmem:[%s3 + $0x118] sm:$0xff]
    %v1010 = vld [vmem:[%s3 + $0x120] sm:$0xff]
    %v1011 = vld [vmem:[%s3 + $0x128] sm:$0xff]
    %v1012 = vld [vmem:[%s3 + $0x130] sm:$0xff]
    %v1013 = vld [vmem:[%s3 + $0x138] sm:$0xff]
    %v1014 = vld [vmem:[%s3 + $0x140] sm:$0xff]
    %v1015 = vld [vmem:[%s3 + $0x148] sm:$0xff]
    %v1016 = vld [vmem:[%s3 + $0x150] sm:$0xff]
    %v1017 = vld [vmem:[%s3 + $0x158] sm:$0xff]
    %v1018 = vld [vmem:[%s3 + $0x160] sm:$0xff]
    %v1019 = vld [vmem:[%s3 + $0x168] sm:$0xff]
    %v1020 = vld [vmem:[%s3 + $0x170] sm:$0xff]
    %v1021 = vld [vmem:[%s3 + $0x178] sm:$0xff]
    %v1022 = vld [vmem:[%s3 + $0x180] sm:$0xff]
    %v1023 = vld [vmem:[%s3 + $0x188] sm:$0xff]
    %v1024 = vld [vmem:[%s3 + $0x190] sm:$0xff]
    %v1025 = vld [vmem:[%s3 + $0x198] sm:$0xff]
    %v1026 = vld [vmem:[%s3 + $0x1a0] sm:$0xff]
    %v1027 = vld [vmem:[%s3 + $0x1a8] sm:$0xff]
    %v1028 = vld [vmem:[%s3 + $0x1b0] sm:$0xff]
    %v1029 = vld [vmem:[%s3 + $0x1b8] sm:$0xff]
    %v1030 = vld [vmem:[%s3 + $0x1c0] sm:$0xff]
    %v1031 = vld [vmem:[%s3 + $0x1c8] sm:$0xff]
    %v1032 = vld [vmem:[%s3 + $0x1d0] sm:$0xff]
    %v1033 = vld [vmem:[%s3 + $0x1d8] sm:$0xff]
    %v1034 = vld [vmem:[%s3 + $0x1e0] sm:$0xff]
    %v1035 = vld [vmem:[%s3 + $0x1e8] sm:$0xff]
    %v1036 = vld [vmem:[%s3 + $0x1f0] sm:$0xff]
    %v1037 = vld [vmem:[%s3 + $0x1f8] sm:$0xff]
    %v1038 = vld [vmem:[%s3 + $0x200] sm:$0xff]
    %v1039 = vld [vmem:[%s3 + $0x208] sm:$0xff]
    %v1040 = vld [vmem:[%s3 + $0x210] sm:$0xff]
    %v1041 = vld [vmem:[%s3 + $0x218] sm:$0xff]
    %v1042 = vld [vmem:[%s3 + $0x220] sm:$0xff]
    %v1043 = vld [vmem:[%s3 + $0x228] sm:$0xff]
    %v1044 = vld [vmem:[%s3 + $0x230] sm:$0xff]
    %v1045 = vld [vmem:[%s3 + $0x238] sm:$0xff]
    %v1046 = vld [vmem:[%s3 + $0x240] sm:$0xff]
    %v1047 = vld [vmem:[%s3 + $0x248] sm:$0xff]
    %v1048 = vld [vmem:[%s3 + $0x250] sm:$0xff]
    %v1049 = vld [vmem:[%s3 + $0x258] sm:$0xff]
    %v1050 = vld [vmem:[%s3 + $0x260] sm:$0xff]
    %v1051 = vld [vmem:[%s3 + $0x268] sm:$0xff]
    %v1052 = vld [vmem:[%s3 + $0x270] sm:$0xff]
    %v1053 = vld [vmem:[%s3 + $0x278] sm:$0xff]
    %v1054 = vld [vmem:[%s3 + $0x280] sm:$0xff]
    %v1055 = vld [vmem:[%s3 + $0x288] sm:$0xff]
    %v1056 = vld [vmem:[%s3 + $0x290] sm:$0xff]
    %v1057 = vld [vmem:[%s3 + $0x298] sm:$0xff]
    %v1058 = vld [vmem:[%s3 + $0x2a0] sm:$0xff]
    %v1059 = vld [vmem:[%s3 + $0x2a8] sm:$0xff]
    %v1060 = vld [vmem:[%s3 + $0x2b0] sm:$0xff]
    %v1061 = vld [vmem:[%s3 + $0x2b8] sm:$0xff]
    %v1062 = vld [vmem:[%s3 + $0x2c0] sm:$0xff]
    %v1063 = vld [vmem:[%s3 + $0x2c8] sm:$0xff]
    %v1064 = vld [vmem:[%s3 + $0x2d0] sm:$0xff]
    %v1065 = vld [vmem:[%s3 + $0x2d8] sm:$0xff]
    %v1066 = vld [vmem:[%s3 + $0x2e0] sm:$0xff]
    %v1067 = vld [vmem:[%s3 + $0x2e8] sm:$0xff]
    %v1068 = vld [vmem:[%s3 + $0x2f0] sm:$0xff]
    %v1069 = vld [vmem:[%s3 + $0x2f8] sm:$0xff]
    %v1070 = vld [vmem:[%s3 + $0x300] sm:$0xff]
    %v1071 = vld [vmem:[%s3 + $0x308] sm:$0xff]
    %v1072 = vld [vmem:[%s3 + $0x310] sm:$0xff]
    %v1073 = vld [vmem:[%s3 + $0x318] sm:$0xff]
    %v1074 = vld [vmem:[%s3 + $0x320] sm:$0xff]
    %v1075 = vld [vmem:[%s3 + $0x328] sm:$0xff]
    %v1076 = vld [vmem:[%s3 + $0x330] sm:$0xff]
    %v1077 = vld [vmem:[%s3 + $0x338] sm:$0xff]
    %v1078 = vld [vmem:[%s3 + $0x340] sm:$0xff]
    %v1079 = vld [vmem:[%s3 + $0x348] sm:$0xff]
    %v1080 = vld [vmem:[%s3 + $0x350] sm:$0xff]
    %v1081 = vld [vmem:[%s3 + $0x358] sm:$0xff]
    %v1082 = vld [vmem:[%s3 + $0x360] sm:$0xff]
    %v1083 = vld [vmem:[%s3 + $0x368] sm:$0xff]
    %v1084 = vld [vmem:[%s3 + $0x370] sm:$0xff]
    %v1085 = vld [vmem:[%s3 + $0x378] sm:$0xff]
    %v1086 = vld [vmem:[%s3 + $0x380] sm:$0xff]
    %v1087 = vld [vmem:[%s3 + $0x388] sm:$0xff]
    %v1088 = vld [vmem:[%s3 + $0x390] sm:$0xff]
    %v1089 = vld [vmem:[%s3 + $0x398] sm:$0xff]
    %v1090 = vld [vmem:[%s3 + $0x3a0] sm:$0xff]
    %v1091 = vld [vmem:[%s3 + $0x3a8] sm:$0xff]
    %v1092 = vld [vmem:[%s3 + $0x3b0] sm:$0xff]
    %v1093 = vld [vmem:[%s3 + $0x3b8] sm:$0xff]
    %v1094 = vld [vmem:[%s3 + $0x3c0] sm:$0xff]
    %v1095 = vld [vmem:[%s3 + $0x3c8] sm:$0xff]
    %v1096 = vld [vmem:[%s3 + $0x3d0] sm:$0xff]
    %v1097 = vld [vmem:[%s3 + $0x3d8] sm:$0xff]
    %v1098 = vld [vmem:[%s3 + $0x3e0] sm:$0xff]
    %v1099 = vld [vmem:[%s3 + $0x3e8] sm:$0xff]
    %v1100 = vld [vmem:[%s3 + $0x3f0] sm:$0xff]
    %v1101 = vld [vmem:[%s3 + $0x3f8] sm:$0xff]
    %v1102 = vld [vmem:[%s4] sm:$0x1]
    %v1104 = vlaneseq
    %v1105 = vshrl.u32 %v1104, 7
    %v1106 = vsub.s32 0, %v1105
    %v1107 = vrot.slane %v1102, %v1106
    %1109 = vmatprep.subr.mxu0 0.0
    %1110 = vmatpush1.msra.mxu0 %v974
    %1111 = vmatprep.subr.mxu0 0.0
    %1112 = vmatpush1.msra.mxu0 %v975
    %1113 = vmatprep.subr.mxu0 0.0
    %1114 = vmatpush1.msra.mxu0 %v976
    %1115 = vmatprep.subr.mxu0 0.0
    %1116 = vmatpush1.msra.mxu0 %v977
    %1117 = vmatprep.subr.mxu0 0.0
    %1118 = vmatpush1.msra.mxu0 %v978
    %1119 = vmatprep.subr.mxu0 0.0
    %1120 = vmatpush1.msra.mxu0 %v979
    %1121 = vmatprep.subr.mxu0 0.0
    %1122 = vmatpush1.msra.mxu0 %v980
    %1123 = vmatprep.subr.mxu0 0.0
    %1124 = vmatpush1.msra.mxu0 %v981
    %1125 = vmatprep.subr.mxu0 0.0
    %1126 = vmatpush1.msra.mxu0 %v982
    %1127 = vmatprep.subr.mxu0 0.0
    %1128 = vmatpush1.msra.mxu0 %v983
    %1129 = vmatprep.subr.mxu0 0.0
    %1130 = vmatpush1.msra.mxu0 %v984
    %1131 = vmatprep.subr.mxu0 0.0
    %1132 = vmatpush1.msra.mxu0 %v985
    %1133 = vmatprep.subr.mxu0 0.0
    %1134 = vmatpush1.msra.mxu0 %v986
    %1135 = vmatprep.subr.mxu0 0.0
    %1136 = vmatpush1.msra.mxu0 %v987
    %1137 = vmatprep.subr.mxu0 0.0
    %1138 = vmatpush1.msra.mxu0 %v988
    %1139 = vmatprep.subr.mxu0 0.0
    %1140 = vmatpush1.msra.mxu0 %v989
    %1141 = vmatprep.subr.mxu0 0.0
    %1142 = vmatpush1.msra.mxu0 %v990
    %1143 = vmatprep.subr.mxu0 0.0
    %1144 = vmatpush1.msra.mxu0 %v991
    %1145 = vmatprep.subr.mxu0 0.0
    %1146 = vmatpush1.msra.mxu0 %v992
    %1147 = vmatprep.subr.mxu0 0.0
    %1148 = vmatpush1.msra.mxu0 %v993
    %1149 = vmatprep.subr.mxu0 0.0
    %1150 = vmatpush1.msra.mxu0 %v994
    %1151 = vmatprep.subr.mxu0 0.0
    %1152 = vmatpush1.msra.mxu0 %v995
    %1153 = vmatprep.subr.mxu0 0.0
    %1154 = vmatpush1.msra.mxu0 %v996
    %1155 = vmatprep.subr.mxu0 0.0
    %1156 = vmatpush1.msra.mxu0 %v997
    %1157 = vmatprep.subr.mxu0 0.0
    %1158 = vmatpush1.msra.mxu0 %v998
    %1159 = vmatprep.subr.mxu0 0.0
    %1160 = vmatpush1.msra.mxu0 %v999
    %1161 = vmatprep.subr.mxu0 0.0
    %1162 = vmatpush1.msra.mxu0 %v1000
    %1163 = vmatprep.subr.mxu0 0.0
    %1164 = vmatpush1.msra.mxu0 %v1001
    %1165 = vmatprep.subr.mxu0 0.0
    %1166 = vmatpush1.msra.mxu0 %v1002
    %1167 = vmatprep.subr.mxu0 0.0
    %1168 = vmatpush1.msra.mxu0 %v1003
    %1169 = vmatprep.subr.mxu0 0.0
    %1170 = vmatpush1.msra.mxu0 %v1004
    %1171 = vmatprep.subr.mxu0 0.0
    %1172 = vmatpush1.msra.mxu0 %v1005
    %1173 = vmatprep.mubr.f32.mxu0 %v967
    %1174 = vmatmul.mubr.f32.gmra.mrb[0].mxu0 %v966
    %v1175 = vpop.f32.mrb[0].mxu0
    %v1176 = vadd.f32 %v1107, %v1175
    %v1177 = vpop.f32.mrb[0].mxu0
    %1178 = vdwg.mxu0
    %1179 = vmatprep.subr.mxu0 0.0
    %1180 = vmatpush1.msra.mxu0 %v1006
    %1181 = vmatprep.subr.mxu0 0.0
    %1182 = vmatpush1.msra.mxu0 %v1007
    %1183 = vmatprep.subr.mxu0 0.0
    %1184 = vmatpush1.msra.mxu0 %v1008
    %1185 = vmatprep.subr.mxu0 0.0
    %1186 = vmatpush1.msra.mxu0 %v1009
    %1187 = vmatprep.subr.mxu0 0.0
    %1188 = vmatpush1.msra.mxu0 %v1010
    %1189 = vmatprep.subr.mxu0 0.0
    %1190 = vmatpush1.msra.mxu0 %v1011
    %1191 = vmatprep.subr.mxu0 0.0
    %1192 = vmatpush1.msra.mxu0 %v1012
    %1193 = vmatprep.subr.mxu0 0.0
    %1194 = vmatpush1.msra.mxu0 %v1013
    %1195 = vmatprep.subr.mxu0 0.0
    %1196 = vmatpush1.msra.mxu0 %v1014
    %1197 = vmatprep.subr.mxu0 0.0
    %1198 = vmatpush1.msra.mxu0 %v1015
    %1199 = vmatprep.subr.mxu0 0.0
    %1200 = vmatpush1.msra.mxu0 %v1016
    %1201 = vmatprep.subr.mxu0 0.0
    %1202 = vmatpush1.msra.mxu0 %v1017
    %1203 = vmatprep.subr.mxu0 0.0
    %1204 = vmatpush1.msra.mxu0 %v1018
    %1205 = vmatprep.subr.mxu0 0.0
    %1206 = vmatpush1.msra.mxu0 %v1019
    %1207 = vmatprep.subr.mxu0 0.0
    %1208 = vmatpush1.msra.mxu0 %v1020
    %1209 = vmatprep.subr.mxu0 0.0
    %1210 = vmatpush1.msra.mxu0 %v1021
    %1211 = vmatprep.subr.mxu0 0.0
    %1212 = vmatpush1.msra.mxu0 %v1022
    %1213 = vmatprep.subr.mxu0 0.0
    %1214 = vmatpush1.msra.mxu0 %v1023
    %1215 = vmatprep.subr.mxu0 0.0
    %1216 = vmatpush1.msra.mxu0 %v1024
    %1217 = vmatprep.subr.mxu0 0.0
    %1218 = vmatpush1.msra.mxu0 %v1025
    %1219 = vmatprep.subr.mxu0 0.0
    %1220 = vmatpush1.msra.mxu0 %v1026
    %1221 = vmatprep.subr.mxu0 0.0
    %1222 = vmatpush1.msra.mxu0 %v1027
    %1223 = vmatprep.subr.mxu0 0.0
    %1224 = vmatpush1.msra.mxu0 %v1028
    %1225 = vmatprep.subr.mxu0 0.0
    %1226 = vmatpush1.msra.mxu0 %v1029
    %1227 = vmatprep.subr.mxu0 0.0
    %1228 = vmatpush1.msra.mxu0 %v1030
    %1229 = vmatprep.subr.mxu0 0.0
    %1230 = vmatpush1.msra.mxu0 %v1031
    %1231 = vmatprep.subr.mxu0 0.0
    %1232 = vmatpush1.msra.mxu0 %v1032
    %1233 = vmatprep.subr.mxu0 0.0
    %1234 = vmatpush1.msra.mxu0 %v1033
    %1235 = vmatprep.subr.mxu0 0.0
    %1236 = vmatpush1.msra.mxu0 %v1034
    %1237 = vmatprep.subr.mxu0 0.0
    %1238 = vmatpush1.msra.mxu0 %v1035
    %1239 = vmatprep.subr.mxu0 0.0
    %1240 = vmatpush1.msra.mxu0 %v1036
    %1241 = vmatprep.subr.mxu0 0.0
    %1242 = vmatpush1.msra.mxu0 %v1037
    %1243 = vmatprep.mubr.f32.mxu0 %v969
    %1244 = vmatmul.mubr.f32.gmra.mrb[0].mxu0 %v968
    %v1245 = vpop.f32.mrb[0].mxu0
    %v1246 = vadd.f32 %v1176, %v1245
    %v1247 = vpop.f32.mrb[0].mxu0
    %1248 = vdwg.mxu0
    %1249 = vmatprep.subr.mxu0 0.0
    %1250 = vmatpush1.msra.mxu0 %v1038
    %1251 = vmatprep.subr.mxu0 0.0
    %1252 = vmatpush1.msra.mxu0 %v1039
    %1253 = vmatprep.subr.mxu0 0.0
    %1254 = vmatpush1.msra.mxu0 %v1040
    %1255 = vmatprep.subr.mxu0 0.0
    %1256 = vmatpush1.msra.mxu0 %v1041
    %1257 = vmatprep.subr.mxu0 0.0
    %1258 = vmatpush1.msra.mxu0 %v1042
    %1259 = vmatprep.subr.mxu0 0.0
    %1260 = vmatpush1.msra.mxu0 %v1043
    %1261 = vmatprep.subr.mxu0 0.0
    %1262 = vmatpush1.msra.mxu0 %v1044
    %1263 = vmatprep.subr.mxu0 0.0
    %1264 = vmatpush1.msra.mxu0 %v1045
    %1265 = vmatprep.subr.mxu0 0.0
    %1266 = vmatpush1.msra.mxu0 %v1046
    %1267 = vmatprep.subr.mxu0 0.0
    %1268 = vmatpush1.msra.mxu0 %v1047
    %1269 = vmatprep.subr.mxu0 0.0
    %1270 = vmatpush1.msra.mxu0 %v1048
    %1271 = vmatprep.subr.mxu0 0.0
    %1272 = vmatpush1.msra.mxu0 %v1049
    %1273 = vmatprep.subr.mxu0 0.0
    %1274 = vmatpush1.msra.mxu0 %v1050
    %1275 = vmatprep.subr.mxu0 0.0
    %1276 = vmatpush1.msra.mxu0 %v1051
    %1277 = vmatprep.subr.mxu0 0.0
    %1278 = vmatpush1.msra.mxu0 %v1052
    %1279 = vmatprep.subr.mxu0 0.0
    %1280 = vmatpush1.msra.mxu0 %v1053
    %1281 = vmatprep.subr.mxu0 0.0
    %1282 = vmatpush1.msra.mxu0 %v1054
    %1283 = vmatprep.subr.mxu0 0.0
    %1284 = vmatpush1.msra.mxu0 %v1055
    %1285 = vmatprep.subr.mxu0 0.0
    %1286 = vmatpush1.msra.mxu0 %v1056
    %1287 = vmatprep.subr.mxu0 0.0
    %1288 = vmatpush1.msra.mxu0 %v1057
    %1289 = vmatprep.subr.mxu0 0.0
    %1290 = vmatpush1.msra.mxu0 %v1058
    %1291 = vmatprep.subr.mxu0 0.0
    %1292 = vmatpush1.msra.mxu0 %v1059
    %1293 = vmatprep.subr.mxu0 0.0
    %1294 = vmatpush1.msra.mxu0 %v1060
    %1295 = vmatprep.subr.mxu0 0.0
    %1296 = vmatpush1.msra.mxu0 %v1061
    %1297 = vmatprep.subr.mxu0 0.0
    %1298 = vmatpush1.msra.mxu0 %v1062
    %1299 = vmatprep.subr.mxu0 0.0
    %1300 = vmatpush1.msra.mxu0 %v1063
    %1301 = vmatprep.subr.mxu0 0.0
    %1302 = vmatpush1.msra.mxu0 %v1064
    %1303 = vmatprep.subr.mxu0 0.0
    %1304 = vmatpush1.msra.mxu0 %v1065
    %1305 = vmatprep.subr.mxu0 0.0
    %1306 = vmatpush1.msra.mxu0 %v1066
    %1307 = vmatprep.subr.mxu0 0.0
    %1308 = vmatpush1.msra.mxu0 %v1067
    %1309 = vmatprep.subr.mxu0 0.0
    %1310 = vmatpush1.msra.mxu0 %v1068
    %1311 = vmatprep.subr.mxu0 0.0
    %1312 = vmatpush1.msra.mxu0 %v1069
    %1313 = vmatprep.mubr.f32.mxu0 %v971
    %1314 = vmatmul.mubr.f32.gmra.mrb[0].mxu0 %v970
    %v1315 = vpop.f32.mrb[0].mxu0
    %v1316 = vadd.f32 %v1246, %v1315
    %v1317 = vpop.f32.mrb[0].mxu0
    %1318 = vdwg.mxu0
    %1319 = vmatprep.subr.mxu0 0.0
    %1320 = vmatpush1.msra.mxu0 %v1070
    %1321 = vmatprep.subr.mxu0 0.0
    %1322 = vmatpush1.msra.mxu0 %v1071
    %1323 = vmatprep.subr.mxu0 0.0
    %1324 = vmatpush1.msra.mxu0 %v1072
    %1325 = vmatprep.subr.mxu0 0.0
    %1326 = vmatpush1.msra.mxu0 %v1073
    %1327 = vmatprep.subr.mxu0 0.0
    %1328 = vmatpush1.msra.mxu0 %v1074
    %1329 = vmatprep.subr.mxu0 0.0
    %1330 = vmatpush1.msra.mxu0 %v1075
    %1331 = vmatprep.subr.mxu0 0.0
    %1332 = vmatpush1.msra.mxu0 %v1076
    %1333 = vmatprep.subr.mxu0 0.0
    %1334 = vmatpush1.msra.mxu0 %v1077
    %1335 = vmatprep.subr.mxu0 0.0
    %1336 = vmatpush1.msra.mxu0 %v1078
    %1337 = vmatprep.subr.mxu0 0.0
    %1338 = vmatpush1.msra.mxu0 %v1079
    %1339 = vmatprep.subr.mxu0 0.0
    %1340 = vmatpush1.msra.mxu0 %v1080
    %1341 = vmatprep.subr.mxu0 0.0
    %1342 = vmatpush1.msra.mxu0 %v1081
    %1343 = vmatprep.subr.mxu0 0.0
    %1344 = vmatpush1.msra.mxu0 %v1082
    %1345 = vmatprep.subr.mxu0 0.0
    %1346 = vmatpush1.msra.mxu0 %v1083
    %1347 = vmatprep.subr.mxu0 0.0
    %1348 = vmatpush1.msra.mxu0 %v1084
    %1349 = vmatprep.subr.mxu0 0.0
    %1350 = vmatpush1.msra.mxu0 %v1085
    %1351 = vmatprep.subr.mxu0 0.0
    %1352 = vmatpush1.msra.mxu0 %v1086
    %1353 = vmatprep.subr.mxu0 0.0
    %1354 = vmatpush1.msra.mxu0 %v1087
    %1355 = vmatprep.subr.mxu0 0.0
    %1356 = vmatpush1.msra.mxu0 %v1088
    %1357 = vmatprep.subr.mxu0 0.0
    %1358 = vmatpush1.msra.mxu0 %v1089
    %1359 = vmatprep.subr.mxu0 0.0
    %1360 = vmatpush1.msra.mxu0 %v1090
    %1361 = vmatprep.subr.mxu0 0.0
    %1362 = vmatpush1.msra.mxu0 %v1091
    %1363 = vmatprep.subr.mxu0 0.0
    %1364 = vmatpush1.msra.mxu0 %v1092
    %1365 = vmatprep.subr.mxu0 0.0
    %1366 = vmatpush1.msra.mxu0 %v1093
    %1367 = vmatprep.subr.mxu0 0.0
    %1368 = vmatpush1.msra.mxu0 %v1094
    %1369 = vmatprep.subr.mxu0 0.0
    %1370 = vmatpush1.msra.mxu0 %v1095
    %1371 = vmatprep.subr.mxu0 0.0
    %1372 = vmatpush1.msra.mxu0 %v1096
    %1373 = vmatprep.subr.mxu0 0.0
    %1374 = vmatpush1.msra.mxu0 %v1097
    %1375 = vmatprep.subr.mxu0 0.0
    %1376 = vmatpush1.msra.mxu0 %v1098
    %1377 = vmatprep.subr.mxu0 0.0
    %1378 = vmatpush1.msra.mxu0 %v1099
    %1379 = vmatprep.subr.mxu0 0.0
    %1380 = vmatpush1.msra.mxu0 %v1100
    %1381 = vmatprep.subr.mxu0 0.0
    %1382 = vmatpush1.msra.mxu0 %v1101
    %1383 = vmatprep.mubr.f32.mxu0 %v973
    %1384 = vmatmul.mubr.f32.gmra.mrb[0].mxu0 %v972
    %v1385 = vpop.f32.mrb[0].mxu0
    %v1386 = vadd.f32 %v1316, %v1385
    %v1387 = vpop.f32.mrb[0].mxu0
    %1388 = vdwg.mxu0
    %vm1389 = vcmask 41984
    %v1390 = vsel %vm1389, %v1386, -inf
    %1391 = vmax.xlane.f32.xlu0 %v1390
    %v1392 = vpop.xlane.xlu0 %1391
    %v1393 = vsub.f32 %v1386, %v1392
    %v1394 = vmul.f32 %v1393, 1.442695
    %v1395 = vpow.pop %v1394
    %v1396 = vsel %vm1389, %v1395, 0.0
    %1397 = vadd.xlane.f32.xlu0 %v1396
    %v1398 = vpop.xlane.xlu0 %1397
    %v1399 = vlog2.pop %v1398
    %v1400 = vmul.f32 %v1399, 0.6931472
    %v1401 = vsub.f32 %v1393, %v1400
    %1402 = vst.msk [vmem:[#allocation2] sm:$0x3] %vm1389, %v1401
    // Predicated region
    $region22: #{tgcn_forward.1} parent=1 // pred_check
      _
    $region23: #{tgcn_forward.1} parent=1 // pred_check_branch
      %1404 = sbr.rel (0) target = $region25
    $region24: #{tgcn_forward.1} parent=1 // pred_region
      %s1406 = ssub.s32 32, 32
      %1407 = vsyncadd [#allocation3], %s1406
      %s1409 = sshll.u32 [#allocation2], 4
      %s1410 = int_to_ptr.vmem [resolvable:$true] %s1409
      %1412 = dma.vmem_to_hbm [thread:$0]  %s1410, 32, %s5, [#allocation3]
    $region25: #{tgcn_forward.1} parent=1 // pred_fallthru
      _
    // Predicated region
    $region26: #{tgcn_forward.1} parent=1 // pred_check
      _
    $region27: #{tgcn_forward.1} parent=1 // pred_check_branch
      %1414 = sbr.rel (0) target = $region29
    $region28: #{tgcn_forward.1} parent=1 // pred_region
      %1415 = dma.done [#allocation3], 32
    $region29: #{tgcn_forward.1} parent=1 // pred_fallthru
      _
    %1416 = vsyncpa [#allocation3], 1

</llo_original>
